<compile_context>
chip_gen: v7x
topology: tpu7x:2x2x1
jax: 0.10.0
libtpu: 0.0.40
codegen_flags: <defaults>
</compile_context>

<pallas_src>
import functools

import jax
import jax.numpy as jnp
import numpy as np
from jax.experimental import pallas as pl
from jax.experimental.pallas import tpu as pltpu


_BLOCK_BUDGET_BYTES = 1 << 20          # ~1 MiB per operand per block
_VMEM_LIMIT_BYTES = 32 * 1024 * 1024   # safe on v5e/v6e (128 MiB) and v7x (64 MiB)


def _compiler_params():
    return pltpu.CompilerParams(
        dimension_semantics=("parallel",),
        vmem_limit_bytes=_VMEM_LIMIT_BYTES)


def _sublane_pack(dtype):
    """Native sublane packing: 8 rows for 4-byte, 16 for 2-byte, 32 for 1-byte."""
    itemsize = jnp.dtype(dtype).itemsize
    return 8 * max(1, 4 // itemsize)


def _choose_tile_rows(total_rows, row_bytes, pack, budget=_BLOCK_BUDGET_BYTES):
    """Largest pack-multiple row tile within the per-operand VMEM budget,
    balanced over the number of blocks so tail padding is < `pack` rows."""
    max_rows = max(pack, (budget // max(1, row_bytes)) // pack * pack)
    n_blocks = -(-total_rows // max_rows)
    # give v7x's two TensorCores at least two steps to split when there is work
    if n_blocks < 2 and total_rows >= 2 * pack:
        n_blocks = 2
    per_block = -(-total_rows // n_blocks)
    return max(pack, -(-per_block // pack) * pack)


def _flatten_rows(a):
    """(B, ..., C) -> (rows, C): adjacent-dim collapse only, no data movement."""
    return a.reshape(-1, a.shape[-1])


def _row_scales(scale, shape):
    """Expand per-sample (B,) scale to a per-row (rows, 1) f32 column."""
    batch = shape[0]
    rows_per_sample = 1
    for d in shape[1:-1]:
        rows_per_sample *= d
    s = jnp.broadcast_to(scale.astype(jnp.float32)[:, None], (batch, rows_per_sample))
    return s.reshape(batch * rows_per_sample, 1)


def drop_path_scale(batch, drop_prob, training, key):
    """Per-sample stochastic-depth scale mask/keep_prob, matching the PyTorch
    floor(keep_prob + U[0,1)) semantics (identity when not training / prob 0)."""
    if drop_prob == 0.0 or not training:
        return jnp.ones((batch,), jnp.float32)
    keep_prob = 1.0 - float(drop_prob)
    u = jax.random.uniform(key, (batch,), dtype=jnp.float32)
    return jnp.floor(keep_prob + u) / keep_prob


# -----------------------------------------------------------------------------
# Pallas kernels
# -----------------------------------------------------------------------------


def _residual_drop_path_kernel(scale_ref, res_ref, br_ref, o_ref):
    """o = residual + scale_row * branch   (pure 2-load / 1-store stream)."""
    x = res_ref[...].astype(jnp.float32) + br_ref[...].astype(jnp.float32) * scale_ref[...]
    o_ref[...] = x.astype(o_ref.dtype)


def _residual_drop_path_ln_kernel(scale_ref, gamma_ref, beta_ref, res_ref, br_ref,
                                  x_ref, ln_ref, *, eps):
    """x = residual + scale_row * branch ; ln = LayerNorm(x) over the lane axis."""
    x = res_ref[...].astype(jnp.float32) + br_ref[...].astype(jnp.float32) * scale_ref[...]
    x_ref[...] = x.astype(x_ref.dtype)
    mu = jnp.mean(x, axis=-1, keepdims=True)
    xc = x - mu
    var = jnp.mean(xc * xc, axis=-1, keepdims=True)
    y = xc * jax.lax.rsqrt(var + eps)
    y = y * gamma_ref[...].astype(jnp.float32) + beta_ref[...].astype(jnp.float32)
    ln_ref[...] = y.astype(ln_ref.dtype)


# -----------------------------------------------------------------------------
# Wrappers
# -----------------------------------------------------------------------------


def fused_residual_drop_path(residual, branch, scale, *, use_pallas=True):
    """residual + scale[b] * branch, per-sample scale (DropPath already folded
    into `scale`). No padding / slicing: ragged last block is masked by Pallas."""
    assert residual.shape == branch.shape
    if not use_pallas:
        bshape = (residual.shape[0],) + (1,) * (residual.ndim - 1)
        out = (residual.astype(jnp.float32)
               + branch.astype(jnp.float32) * scale.astype(jnp.float32).reshape(bshape))
        return out.astype(residual.dtype)

    res2 = _flatten_rows(residual)
    br2 = _flatten_rows(branch)
    rows, chans = res2.shape
    scale_rows = _row_scales(scale, residual.shape)

    pack = _sublane_pack(residual.dtype)
    row_bytes = chans * jnp.dtype(residual.dtype).itemsize
    tile_rows = _choose_tile_rows(rows, row_bytes, pack)

    blk = pl.BlockSpec((tile_rows, chans), lambda i: (i, 0))
    scale_blk = pl.BlockSpec((tile_rows, 1), lambda i: (i, 0))

    out = pl.pallas_call(
        _residual_drop_path_kernel,
        out_shape=jax.ShapeDtypeStruct((rows, chans), residual.dtype),
        grid=(pl.cdiv(rows, tile_rows),),
        in_specs=[scale_blk, blk, blk],
        out_specs=blk,
        input_output_aliases={1: 0},            # output aliases the residual input
        compiler_params=_compiler_params(),
    )(scale_rows, res2, br2)
    return out.reshape(residual.shape)


def fused_residual_drop_path_layernorm(residual, branch, scale, gamma, beta,
                                       *, eps=1e-5, use_pallas=True):
    """Returns (x, ln_x): x = residual + scale[b]*branch, ln_x = LayerNorm(x).
    Fusing the following LayerNorm removes one full activation read+write."""
    assert residual.shape == branch.shape
    chans = residual.shape[-1]

    if not use_pallas:
        bshape = (residual.shape[0],) + (1,) * (residual.ndim - 1)
        x = (residual.astype(jnp.float32)
             + branch.astype(jnp.float32) * scale.astype(jnp.float32).reshape(bshape))
        mu = jnp.mean(x, axis=-1, keepdims=True)
        var = jnp.mean(jnp.square(x - mu), axis=-1, keepdims=True)
        ln = (x - mu) * jax.lax.rsqrt(var + eps) * gamma + beta
        return x.astype(residual.dtype), ln.astype(residual.dtype)

    res2 = _flatten_rows(residual)
    br2 = _flatten_rows(branch)
    rows = res2.shape[0]
    scale_rows = _row_scales(scale, residual.shape)

    pack = _sublane_pack(residual.dtype)
    row_bytes = chans * jnp.dtype(residual.dtype).itemsize
    tile_rows = _choose_tile_rows(rows, row_bytes, pack)

    blk = pl.BlockSpec((tile_rows, chans), lambda i: (i, 0))
    scale_blk = pl.BlockSpec((tile_rows, 1), lambda i: (i, 0))
    par_blk = pl.BlockSpec((1, chans), lambda i: (0, 0))

    x2, ln2 = pl.pallas_call(
        functools.partial(_residual_drop_path_ln_kernel, eps=float(eps)),
        out_shape=(jax.ShapeDtypeStruct((rows, chans), residual.dtype),
                   jax.ShapeDtypeStruct((rows, chans), residual.dtype)),
        grid=(pl.cdiv(rows, tile_rows),),
        in_specs=[scale_blk, par_blk, par_blk, blk, blk],
        out_specs=(blk, blk),
        input_output_aliases={3: 0},            # x output aliases the residual input
        compiler_params=_compiler_params(),
    )(scale_rows, gamma.reshape(1, chans), beta.reshape(1, chans), res2, br2)
    return x2.reshape(residual.shape), ln2.reshape(residual.shape)


# -----------------------------------------------------------------------------
# ReferenceBlock forward (default config: dim == dim_out, kernel_q=kernel_kv=
# (1,1), stride=(1,1) -> all pools / pool_skip disabled, no extra proj).
# -----------------------------------------------------------------------------


def _layer_norm(x, gamma, beta, eps=1e-5):
    mu = jnp.mean(x, axis=-1, keepdims=True)
    var = jnp.mean(jnp.square(x - mu), axis=-1, keepdims=True)
    return (x - mu) * jax.lax.rsqrt(var + eps) * gamma + beta


def _linear(x, p):
    y = x @ p["w"]
    if p["b"] is not None:
        y = y + p["b"]
    return y


def init_reference_block_params(key, dim, mlp_ratio=4.0, qkv_bias=False):
    ks = jax.random.split(key, 6)

    def lin(k, fan_in, fan_out, bias):
        w = jax.random.normal(k, (fan_in, fan_out), jnp.float32) * 0.02
        return {"w": w, "b": jnp.zeros((fan_out,), jnp.float32) if bias else None}

    hidden = int(dim * mlp_ratio)
    return {
        "norm1": {"g": jnp.ones((dim,), jnp.float32), "b": jnp.zeros((dim,), jnp.float32)},
        "norm2": {"g": jnp.ones((dim,), jnp.float32), "b": jnp.zeros((dim,), jnp.float32)},
        "q": lin(ks[0], dim, dim, qkv_bias),
        "k": lin(ks[1], dim, dim, qkv_bias),
        "v": lin(ks[2], dim, dim, qkv_bias),
        "proj": lin(ks[3], dim, dim, True),
        "fc1": lin(ks[4], dim, hidden, True),
        "fc2": lin(ks[5], hidden, dim, True),
    }


def _reference_attention(params, x, x_ref, num_heads, has_cls_embed=True):
    """x: (B, T1, N, C) queries; x_ref: (B, T2, N, C) keys/values. Pools disabled."""
    B, T1, N, C = x.shape
    T2 = x_ref.shape[1]
    hd = C // num_heads
    scale = hd ** (-0.5)

    def project(a, T, p):
        a = _linear(a.reshape(B * T, N, C), p)
        a = a.reshape(B, T, N, num_heads, hd)
        return jnp.transpose(a, (0, 1, 3, 2, 4))          # b t nh n nd

    q = project(x, T1, params["q"])
    k = project(x_ref, T2, params["k"])
    v = project(x_ref, T2, params["v"])

    def merge_t(a, T):                                     # b t nh n nd -> b nh (t n) nd
        return jnp.transpose(a, (0, 2, 1, 3, 4)).reshape(B, num_heads, T * N, hd)

    q = merge_t(q, T1)
    k = merge_t(k, T2)
    v = merge_t(v, T2)

    attn = jnp.einsum("bhqd,bhkd->bhqk", q * scale, k)
    attn = jax.nn.softmax(attn, axis=-1)
    out = jnp.einsum("bhqk,bhkd->bhqd", attn, v)

    if has_cls_embed:
        out = out.at[:, :, 1:, :].add(q[:, :, 1:, :])
    else:
        out = out + q

    out = jnp.transpose(out, (0, 2, 1, 3)).reshape(B, T1 * N, C)
    out = _linear(out, params["proj"])
    return out.reshape(B, T1, N, C)


def reference_block_forward(params, x, x_ref, *, num_heads, drop_path_rate,
                            training, rng_key, has_cls_embed=True, use_pallas=True):
    """x, x_ref: (B, C, T, H, W) exactly as PyTorch ReferenceBlock.forward."""
    B, C, T1, H, W = x.shape
    T2 = x_ref.shape[2]

    def to_tokens(a, T):            # 'b c t h w -> b t (h w) c'
        return jnp.transpose(a, (0, 2, 3, 4, 1)).reshape(B, T, H * W, C)

    xt = to_tokens(x, T1)
    xrt = to_tokens(x_ref, T2)

    k1, k2 = jax.random.split(rng_key)
    scale1 = drop_path_scale(B, drop_path_rate, training, k1)
    scale2 = drop_path_scale(B, drop_path_rate, training, k2)

    x_norm = _layer_norm(xt, params["norm1"]["g"], params["norm1"]["b"])
    x_block = _reference_attention(params, x_norm, xrt, num_heads, has_cls_embed)

    # junction 1:  x = x_res + drop_path(x_block), fused with the following norm2
    xt, x_norm2 = fused_residual_drop_path_layernorm(
        xt, x_block, scale1, params["norm2"]["g"], params["norm2"]["b"],
        use_pallas=use_pallas)

    h = jax.nn.gelu(_linear(x_norm2, params["fc1"]), approximate=False)
    x_mlp = _linear(h, params["fc2"])

    # junction 2:  x = x + drop_path(x_mlp)
    drop_active = training and drop_path_rate > 0.0
    if use_pallas and drop_active:
        xt = fused_residual_drop_path(xt, x_mlp, scale2)
    else:
        # identity DropPath: leave the add to XLA so it fuses into fc2's epilogue
        xt = fused_residual_drop_path(xt, x_mlp, scale2, use_pallas=False)

    # 'b t (h w) c -> b c t h w'   (hw unchanged: no query pooling)
    return jnp.transpose(xt.reshape(B, T1, H, W, C), (0, 4, 1, 2, 3))


if __name__ == "__main__":
    root = jax.random.PRNGKey(0)
    k_x, k_xr, k_params, k_drop, k_a, k_b, k_c, k_d, k_e = jax.random.split(root, 9)

    # Shapes consistent with ReferenceBlock.forward: x, x_ref are (B, C, T, H, W);
    # dim == dim_out == 32, 4 heads, mlp_ratio 4.
    B, C, T, H, W = 2, 32, 2, 4, 4
    NUM_HEADS = 4
    DROP_PATH = 0.3

    x = jax.random.normal(k_x, (B, C, T, H, W), dtype=jnp.float32)
    x_ref = jax.random.normal(k_xr, (B, C, T, H, W), dtype=jnp.float32)
    params = init_reference_block_params(k_params, dim=C, mlp_ratio=4.0, qkv_bias=False)

    # --- 1. standalone check of the streaming residual + DropPath kernel ----
    res = jax.random.normal(k_a, (B, 4, 16, 16), dtype=jnp.float32)
    br = jax.random.normal(k_b, (B, 4, 16, 16), dtype=jnp.float32)
    scale = drop_path_scale(B, DROP_PATH, True, k_c)
    got = jax.block_until_ready(fused_residual_drop_path(res, br, scale))
    want = fused_residual_drop_path(res, br, scale, use_pallas=False)
    np.testing.assert_allclose(np.asarray(got), np.asarray(want), rtol=1e-5, atol=1e-5)

    # per-sample semantics: each sample is residual (dropped) or residual + branch/keep_prob
    keep_prob = 1.0 - DROP_PATH
    g = np.asarray(got).reshape(B, -1)
    r = np.asarray(res).reshape(B, -1)
    v = np.asarray(br).reshape(B, -1)
    for i in range(B):
        kept = np.allclose(g[i], r[i] + v[i] / keep_prob, rtol=1e-5, atol=1e-5)
        dropped = np.allclose(g[i], r[i], rtol=1e-5, atol=1e-5)
        assert kept or dropped

    # ragged row count + non-128 channel count (no pad / slice path anymore)
    res_odd = jax.random.normal(k_a, (B, 5, 24), dtype=jnp.float32)
    br_odd = jax.random.normal(k_b, (B, 5, 24), dtype=jnp.float32)
    got_odd = jax.block_until_ready(fused_residual_drop_path(res_odd, br_odd, scale))
    want_odd = fused_residual_drop_path(res_odd, br_odd, scale, use_pallas=False)
    np.testing.assert_allclose(np.asarray(got_odd), np.asarray(want_odd),
                               rtol=1e-5, atol=1e-5)

    # --- 2. standalone check of the fused residual + DropPath + LayerNorm ---
    res2 = jax.random.normal(k_a, (B, 37, C), dtype=jnp.float32)
    br2 = jax.random.normal(k_b, (B, 37, C), dtype=jnp.float32)
    gamma = 1.0 + 0.1 * jax.random.normal(k_d, (C,), dtype=jnp.float32)
    beta = 0.1 * jax.random.normal(k_e, (C,), dtype=jnp.float32)
    x_got, ln_got = fused_residual_drop_path_layernorm(res2, br2, scale, gamma, beta)
    jax.block_until_ready((x_got, ln_got))
    x_want, ln_want = fused_residual_drop_path_layernorm(res2, br2, scale, gamma, beta,
                                                         use_pallas=False)
    np.testing.assert_allclose(np.asarray(x_got), np.asarray(x_want), rtol=1e-5, atol=1e-5)
    np.testing.assert_allclose(np.asarray(ln_got), np.asarray(ln_want), rtol=1e-4, atol=1e-5)

    # --- 3. full ReferenceBlock forward: Pallas vs pure-jnp reference --------
    fwd_train = jax.jit(functools.partial(
        reference_block_forward, num_heads=NUM_HEADS, drop_path_rate=DROP_PATH,
        training=True, use_pallas=True))
    y_train = jax.block_until_ready(fwd_train(params, x, x_ref, rng_key=k_drop))
    y_train_ref = reference_block_forward(
        params, x, x_ref, num_heads=NUM_HEADS, drop_path_rate=DROP_PATH,
        training=True, rng_key=k_drop, use_pallas=False)
    assert y_train.shape == (B, C, T, H, W)
    np.testing.assert_allclose(np.asarray(y_train), np.asarray(y_train_ref),
                               rtol=1e-4, atol=1e-4)

    # eval path: DropPath is identity (scale == 1) and junction 2 stays in XLA
    fwd_eval = jax.jit(functools.partial(
        reference_block_forward, num_heads=NUM_HEADS, drop_path_rate=DROP_PATH,
        training=False, use_pallas=True))
    y_eval = jax.block_until_ready(fwd_eval(params, x, x_ref, rng_key=k_drop))
    y_eval_ref = reference_block_forward(
        params, x, x_ref, num_heads=NUM_HEADS, drop_path_rate=DROP_PATH,
        training=False, rng_key=k_drop, use_pallas=False)
    np.testing.assert_allclose(np.asarray(y_eval), np.asarray(y_eval_ref),
                               rtol=1e-4, atol=1e-4)

    print("KERNEL_OK")
</pallas_src>

<mosaic_0001>
module attributes {stable_mosaic.version = 11 : i64} {
  func.func @_residual_drop_path_kernel(%arg0: i32, %arg1: memref<64x1xf32, #tpu.memory_space<vmem>>, %arg2: memref<64x16xf32, #tpu.memory_space<vmem>>, %arg3: memref<64x16xf32, #tpu.memory_space<vmem>>, %arg4: memref<64x16xf32, #tpu.memory_space<vmem>>) attributes {dimension_semantics = [#tpu.dimension_semantics<parallel>], iteration_bounds = array<i64: 2>, scalar_prefetch = 0 : i64, scratch_operands = 0 : i64, tpu.core_type = #tpu.core_type<tc>, window_params = [{transform_indices = @transform_0, window_bounds = array<i64: 64, 1>}, {transform_indices = @transform_1, window_bounds = array<i64: 64, 16>}, {transform_indices = @transform_2, window_bounds = array<i64: 64, 16>}, {transform_indices = @transform_3, window_bounds = array<i64: 64, 16>}]} {
    %c0 = arith.constant 0 : index
    %c0_0 = arith.constant 0 : index
    %0 = vector.load %arg2[%c0, %c0_0] : memref<64x16xf32, #tpu.memory_space<vmem>>, vector<64x16xf32>
    %c0_1 = arith.constant 0 : index
    %c0_2 = arith.constant 0 : index
    %1 = vector.load %arg3[%c0_1, %c0_2] : memref<64x16xf32, #tpu.memory_space<vmem>>, vector<64x16xf32>
    %c0_3 = arith.constant 0 : index
    %c0_4 = arith.constant 0 : index
    %2 = vector.load %arg1[%c0_3, %c0_4] : memref<64x1xf32, #tpu.memory_space<vmem>>, vector<64x1xf32>
    %3 = vector.broadcast %2 : vector<64x1xf32> to vector<64x16xf32>
    %4 = arith.mulf %1, %3 : vector<64x16xf32>
    %5 = arith.addf %0, %4 : vector<64x16xf32>
    %c0_5 = arith.constant 0 : index
    %c0_6 = arith.constant 0 : index
    %6 = vector.load %arg4[%c0_5, %c0_6] : memref<64x16xf32, #tpu.memory_space<vmem>>, vector<64x16xf32>
    tpu.vector_store %arg4[%c0_5, %c0_6], %5 {strides = array<i32>} : memref<64x16xf32, #tpu.memory_space<vmem>>, vector<64x16xf32>,
    return
  }
  func.func @transform_0(%arg0: i32) -> (i32, i32) {
    %c0_i32 = arith.constant 0 : i32
    %c0_i32_0 = arith.constant 0 : i32
    return %arg0, %c0_i32 : i32, i32
  }
  func.func @transform_1(%arg0: i32) -> (i32, i32) {
    %c0_i32 = arith.constant 0 : i32
    %c0_i32_0 = arith.constant 0 : i32
    return %arg0, %c0_i32 : i32, i32
  }
  func.func @transform_2(%arg0: i32) -> (i32, i32) {
    %c0_i32 = arith.constant 0 : i32
    %c0_i32_0 = arith.constant 0 : i32
    return %arg0, %c0_i32 : i32, i32
  }
  func.func @transform_3(%arg0: i32) -> (i32, i32) {
    %c0_i32 = arith.constant 0 : i32
    %c0_i32_0 = arith.constant 0 : i32
    return %arg0, %c0_i32 : i32, i32
  }
}

</mosaic_0001>

<llo_original>
// kernel: tpu_custom_call.1
$region0: #{tpu_custom_call.1}
  #allocation0 [shape = 'u32[]', space=smem, size = 0x4, offset = 0x4, fixed_abs, tag = 'smem constant byte address 0x4 - core index']
  #allocation1 [shape = 'u32[144,128]{1,0:T(1,128)}', space=vmem, size = 0x12000, scoped, tag = 'internal scratch']
  %s0 = inlined_call_operand.vmem [shape: f32[128,1], index: 0, kind: input, shape index: {}]
  %s1 = inlined_call_operand.vmem [shape: f32[128,16], index: 1, kind: input, shape index: {}, may-alias: {1,3}]
  %s2 = inlined_call_operand.vmem [shape: f32[128,16], index: 2, kind: input, shape index: {}]
  %s3 = inlined_call_operand.vmem [shape: f32[128,16], index: 3, kind: output, shape index: {}, may-alias: {1,3}]
  %s4 = sld [smem:[#allocation0]]
  $region45: #{tpu_custom_call.1} parent=0
    _
  %s6 = ssub.s32 1, %s4
  %s7 = scalar_select 0, %s6, %s4
  loop: start=0, step=1, limit=4
  $region2: #{tpu_custom_call.1} parent=0 // loop_pre_header
    _
  $region3: #{tpu_custom_call.1} parent=0 // loop_header
    %s9 = sphi 0, %s13
    %p10 = scmp.ge.s32.totalorder %s9, 4
    %s19 = sphi 0, %s21
    %s22 = sphi 0, %s19
    %s23 = sphi 0, %s22
    %s39 = sphi 0, %s23
    %s45 = sphi 0, %s47
    %s48 = sphi 0, %s45
    %s49 = sphi 0, %s48
    %s65 = sphi 0, %s49
    %s71 = sphi 0, %s73
    %s74 = sphi 0, %s71
    %s75 = sphi 0, %s74
    %s91 = sphi 0, %s75
    %s97 = sphi 0, %s99
    %s100 = sphi 0, %s97
    %s101 = sphi 0, %s100
    %s117 = sphi 0, %s101
  $region4: #{tpu_custom_call.1} parent=0 // loop_header_branch
    %12 = sbr.rel (%p10) target = $region8
  $region5: #{tpu_custom_call.1} parent=0 // loop_body
    %s14 = ssub.s32 %s9, 1
    %s15 = ssub.s32 %s9, 2
    %s16 = sadd.s32 %s9, 1
    %s17 = ssub.s32 %s9, %s16
    %p18 = scmp.eq.s32.totalorder %s17, 0
    %s20 = sadd.s32 %s19, 1
    %s21 = scalar_select %p18, %s19, %s20
    %p24 = pneg %p18
    %p25 = scmp.eq.s32.totalorder %s9, 1
    %p26 = por %p24, %p25
    %p27 = scmp.ne.s32.totalorder %s19, %s22
    %p28 = scmp.eq.s32.totalorder %s9, 0
    %p29 = por %p27, %p28
    %p30 = scmp.ne.s32.totalorder %s19, %s22
    %p31 = scmp.eq.s32.totalorder %s14, 1
    %p32 = por %p30, %p31
    %p33 = scmp.ne.s32.totalorder %s22, %s23
    %p34 = scmp.eq.s32.totalorder %s14, 0
    %p35 = por %p33, %p34
    %p36 = scmp.ne.s32.totalorder %s22, %s23
    %p37 = scmp.eq.s32.totalorder %s15, 1
    %p38 = por %p36, %p37
    %p40 = scmp.ne.s32.totalorder %s23, %s39
    %p41 = scmp.eq.s32.totalorder %s15, 0
    %p42 = por %p40, %p41
    %s43 = ssub.s32 %s9, %s16
    %p44 = scmp.eq.s32.totalorder %s43, 0
    %s46 = sadd.s32 %s45, 1
    %s47 = scalar_select %p44, %s45, %s46
    %p50 = pneg %p44
    %p51 = scmp.eq.s32.totalorder %s9, 1
    %p52 = por %p50, %p51
    %p53 = scmp.ne.s32.totalorder %s45, %s48
    %p54 = scmp.eq.s32.totalorder %s9, 0
    %p55 = por %p53, %p54
    %p56 = scmp.ne.s32.totalorder %s45, %s48
    %p57 = scmp.eq.s32.totalorder %s14, 1
    %p58 = por %p56, %p57
    %p59 = scmp.ne.s32.totalorder %s48, %s49
    %p60 = scmp.eq.s32.totalorder %s14, 0
    %p61 = por %p59, %p60
    %p62 = scmp.ne.s32.totalorder %s48, %s49
    %p63 = scmp.eq.s32.totalorder %s15, 1
    %p64 = por %p62, %p63
    %p66 = scmp.ne.s32.totalorder %s49, %s65
    %p67 = scmp.eq.s32.totalorder %s15, 0
    %p68 = por %p66, %p67
    %s69 = ssub.s32 %s9, %s16
    %p70 = scmp.eq.s32.totalorder %s69, 0
    %s72 = sadd.s32 %s71, 1
    %s73 = scalar_select %p70, %s71, %s72
    %p76 = pneg %p70
    %p77 = scmp.eq.s32.totalorder %s9, 1
    %p78 = por %p76, %p77
    %p79 = scmp.ne.s32.totalorder %s71, %s74
    %p80 = scmp.eq.s32.totalorder %s9, 0
    %p81 = por %p79, %p80
    %p82 = scmp.ne.s32.totalorder %s71, %s74
    %p83 = scmp.eq.s32.totalorder %s14, 1
    %p84 = por %p82, %p83
    %p85 = scmp.ne.s32.totalorder %s74, %s75
    %p86 = scmp.eq.s32.totalorder %s14, 0
    %p87 = por %p85, %p86
    %p88 = scmp.ne.s32.totalorder %s74, %s75
    %p89 = scmp.eq.s32.totalorder %s15, 1
    %p90 = por %p88, %p89
    %p92 = scmp.ne.s32.totalorder %s75, %s91
    %p93 = scmp.eq.s32.totalorder %s15, 0
    %p94 = por %p92, %p93
    %s95 = ssub.s32 %s9, %s16
    %p96 = scmp.eq.s32.totalorder %s95, 0
    %s98 = sadd.s32 %s97, 1
    %s99 = scalar_select %p96, %s97, %s98
    %p102 = pneg %p96
    %p103 = scmp.eq.s32.totalorder %s9, 1
    %p104 = por %p102, %p103
    %p105 = scmp.ne.s32.totalorder %s97, %s100
    %p106 = scmp.eq.s32.totalorder %s9, 0
    %p107 = por %p105, %p106
    %p108 = scmp.ne.s32.totalorder %s97, %s100
    %p109 = scmp.eq.s32.totalorder %s14, 1
    %p110 = por %p108, %p109
    %p111 = scmp.ne.s32.totalorder %s100, %s101
    %p112 = scmp.eq.s32.totalorder %s14, 0
    %p113 = por %p111, %p112
    %p114 = scmp.ne.s32.totalorder %s100, %s101
    %p115 = scmp.eq.s32.totalorder %s15, 1
    %p116 = por %p114, %p115
    %p118 = scmp.ne.s32.totalorder %s101, %s117
    %p119 = scmp.eq.s32.totalorder %s15, 0
    %p120 = por %p118, %p119
    %p121 = scmp.le.s32.totalorder 1, %s9
    %p122 = scmp.lt.s32.totalorder %s9, 3
    %p123 = pnand %p121, %p122
    %p124 = pneg %p123
    // Predicated region
    $region9: #{tpu_custom_call.1} parent=5 // pred_check
      _
    $region10: #{tpu_custom_call.1} parent=5 // pred_check_branch
      %126 = sbr.rel (%p123) target = $region12
    $region11: #{tpu_custom_call.1} parent=5 // pred_region
      %s127 = ssub.s32 %s9, 1
    $region12: #{tpu_custom_call.1} parent=5 // pred_fallthru
      _
    %p128 = scmp.lt.s32.totalorder %s9, 2
    // Predicated region
    $region13: #{tpu_custom_call.1} parent=5 // pred_check
      %p129 = pneg %p128
    $region14: #{tpu_custom_call.1} parent=5 // pred_check_branch
      %131 = sbr.rel (%p129) target = $region16
    $region15: #{tpu_custom_call.1} parent=5 // pred_region
      // Predicated region
      $region17: #{tpu_custom_call.1} parent=15 // pred_check
        %p132 = pneg %p29
      $region18: #{tpu_custom_call.1} parent=15 // pred_check_branch
        %134 = sbr.rel (%p132) target = $region20
      $region19: #{tpu_custom_call.1} parent=15 // pred_region
        %s135 = smul.u32 8, %s9
        %p136 = scmp.lt.s32.totalorder %s135, 15
        %s137 = scalar_select %p136, %s135, 15
        %s138 = smul.addr %s137, 8
        %s139 = scalar_lea.vmem %s0, %s138
        %s140 = smul.u32 8, %s9
      $region20: #{tpu_custom_call.1} parent=15 // pred_fallthru
        _
      // Predicated region
      $region21: #{tpu_custom_call.1} parent=15 // pred_check
        %p141 = pneg %p55
      $region22: #{tpu_custom_call.1} parent=15 // pred_check_branch
        %143 = sbr.rel (%p141) target = $region24
      $region23: #{tpu_custom_call.1} parent=15 // pred_region
        %s144 = smul.u32 8, %s9
        %p145 = scmp.lt.s32.totalorder %s144, 15
        %s146 = scalar_select %p145, %s144, 15
        %s147 = smul.addr %s146, 8
        %s148 = scalar_lea.vmem %s1, %s147
        %s149 = smul.u32 8, %s9
      $region24: #{tpu_custom_call.1} parent=15 // pred_fallthru
        _
      // Predicated region
      $region25: #{tpu_custom_call.1} parent=15 // pred_check
        %p150 = pneg %p81
      $region26: #{tpu_custom_call.1} parent=15 // pred_check_branch
        %152 = sbr.rel (%p150) target = $region28
      $region27: #{tpu_custom_call.1} parent=15 // pred_region
        %s153 = smul.u32 8, %s9
        %p154 = scmp.lt.s32.totalorder %s153, 15
        %s155 = scalar_select %p154, %s153, 15
        %s156 = smul.addr %s155, 8
        %s157 = scalar_lea.vmem %s2, %s156
        %s158 = smul.u32 8, %s9
      $region28: #{tpu_custom_call.1} parent=15 // pred_fallthru
        _
    $region16: #{tpu_custom_call.1} parent=5 // pred_fallthru
      _
    %p159 = scmp.le.s32.totalorder 1, %s9
    %p160 = scmp.lt.s32.totalorder %s9, 3
    %p161 = pnand %p159, %p160
    %p162 = pneg %p161
    // Predicated region
    $region29: #{tpu_custom_call.1} parent=5 // pred_check
      _
    $region30: #{tpu_custom_call.1} parent=5 // pred_check_branch
      %164 = sbr.rel (%p161) target = $region32
    $region31: #{tpu_custom_call.1} parent=5 // pred_region
      %s165 = ssub.s32 %s9, 1
      %s166 = smul.u32 8, %s14
      %p167 = scmp.lt.s32.totalorder %s166, 15
      %s168 = scalar_select %p167, %s166, 15
      %s169 = smul.addr %s168, 8
      %s170 = scalar_lea.vmem %s0, %s169
      %p171 = pneg %p35
      %p172 = pneg %p32
      %s173 = smul.u32 8, %s14
      %p174 = scmp.lt.s32.totalorder %s173, 15
      %s175 = scalar_select %p174, %s173, 15
      %s176 = smul.addr %s175, 8
      %s177 = scalar_lea.vmem %s1, %s176
      %p178 = pneg %p61
      %p179 = pneg %p58
      %s180 = smul.u32 8, %s14
      %p181 = scmp.lt.s32.totalorder %s180, 15
      %s182 = scalar_select %p181, %s180, 15
      %s183 = smul.addr %s182, 8
      %s184 = scalar_lea.vmem %s2, %s183
      %p185 = pneg %p87
      %p186 = pneg %p84
      %p187 = pneg %p113
      %p188 = pneg %p110
      %s189 = smul.u32 8, %s14
      %p190 = scmp.lt.s32.totalorder %s189, 15
      %s191 = scalar_select %p190, %s189, 15
      %s192 = smul.addr %s191, 8
      %s193 = scalar_lea.vmem %s3, %s192
      %s194 = smul.u32 8, %s14
      %p195 = scmp.lt.s32.totalorder %s194, 15
      %s196 = scalar_select %p195, %s194, 15
      %s197 = smul.addr %s196, 8
      %s198 = scalar_lea.vmem %s0, %s197
      %s199 = smul.u32 8, %s14
      %s200 = smul.u32 8, %s14
      %p201 = scmp.lt.s32.totalorder %s200, 15
      %s202 = scalar_select %p201, %s200, 15
      %s203 = smul.addr %s202, 8
      %s204 = scalar_lea.vmem %s1, %s203
      %s205 = smul.u32 8, %s14
      %s206 = smul.u32 8, %s14
      %p207 = scmp.lt.s32.totalorder %s206, 15
      %s208 = scalar_select %p207, %s206, 15
      %s209 = smul.addr %s208, 8
      %s210 = scalar_lea.vmem %s2, %s209
      %s211 = smul.u32 8, %s14
      %s212 = smul.u32 8, %s14
      %p213 = scmp.lt.s32.totalorder %s212, 15
      %s214 = scalar_select %p213, %s212, 15
      %s215 = smul.addr %s214, 8
      %s216 = scalar_lea.vmem %s3, %s215
      %s217 = smul.u32 8, %s14
      %v218 = vld [vmem:[%s204] sm:$0xff]
      %v219 = vld [vmem:[%s204 + $0x8] sm:$0xff]
      %v220 = vld [vmem:[%s204 + $0x10] sm:$0xff]
      %v221 = vld [vmem:[%s204 + $0x18] sm:$0xff]
      %v222 = vld [vmem:[%s204 + $0x20] sm:$0xff]
      %v223 = vld [vmem:[%s204 + $0x28] sm:$0xff]
      %v224 = vld [vmem:[%s204 + $0x30] sm:$0xff]
      %v225 = vld [vmem:[%s204 + $0x38] sm:$0xff]
      %v226 = vld [vmem:[%s210] sm:$0xff]
      %v227 = vld [vmem:[%s210 + $0x8] sm:$0xff]
      %v228 = vld [vmem:[%s210 + $0x10] sm:$0xff]
      %v229 = vld [vmem:[%s210 + $0x18] sm:$0xff]
      %v230 = vld [vmem:[%s210 + $0x20] sm:$0xff]
      %v231 = vld [vmem:[%s210 + $0x28] sm:$0xff]
      %v232 = vld [vmem:[%s210 + $0x30] sm:$0xff]
      %v233 = vld [vmem:[%s210 + $0x38] sm:$0xff]
      %v234 = vld [vmem:[%s198] sm:$0xff]
      %v235 = vld [vmem:[%s198 + $0x8] sm:$0xff]
      %v236 = vld [vmem:[%s198 + $0x10] sm:$0xff]
      %v237 = vld [vmem:[%s198 + $0x18] sm:$0xff]
      %v238 = vld [vmem:[%s198 + $0x20] sm:$0xff]
      %v239 = vld [vmem:[%s198 + $0x28] sm:$0xff]
      %v240 = vld [vmem:[%s198 + $0x30] sm:$0xff]
      %v241 = vld [vmem:[%s198 + $0x38] sm:$0xff]
      %243 = vset.pattern.permute.xlu0 0
      %244 = vperm.xlu0 %243, %v234
      %v245 = vpop.permute.xlu0 %244
      %248 = vset.pattern.permute.xlu0 0
      %249 = vperm.xlu0 %248, %v235
      %v250 = vpop.permute.xlu0 %249
      %253 = vset.pattern.permute.xlu0 0
      %254 = vperm.xlu0 %253, %v236
      %v255 = vpop.permute.xlu0 %254
      %258 = vset.pattern.permute.xlu0 0
      %259 = vperm.xlu0 %258, %v237
      %v260 = vpop.permute.xlu0 %259
      %263 = vset.pattern.permute.xlu0 0
      %264 = vperm.xlu0 %263, %v238
      %v265 = vpop.permute.xlu0 %264
      %268 = vset.pattern.permute.xlu0 0
      %269 = vperm.xlu0 %268, %v239
      %v270 = vpop.permute.xlu0 %269
      %273 = vset.pattern.permute.xlu0 0
      %274 = vperm.xlu0 %273, %v240
      %v275 = vpop.permute.xlu0 %274
      %278 = vset.pattern.permute.xlu0 0
      %279 = vperm.xlu0 %278, %v241
      %v280 = vpop.permute.xlu0 %279
      %v282 = vmul.f32 %v226, %v245
      %v283 = vmul.f32 %v227, %v250
      %v284 = vmul.f32 %v228, %v255
      %v285 = vmul.f32 %v229, %v260
      %v286 = vmul.f32 %v230, %v265
      %v287 = vmul.f32 %v231, %v270
      %v288 = vmul.f32 %v232, %v275
      %v289 = vmul.f32 %v233, %v280
      %v290 = vadd.f32 %v218, %v282
      %v291 = vadd.f32 %v219, %v283
      %v292 = vadd.f32 %v220, %v284
      %v293 = vadd.f32 %v221, %v285
      %v294 = vadd.f32 %v222, %v286
      %v295 = vadd.f32 %v223, %v287
      %v296 = vadd.f32 %v224, %v288
      %v297 = vadd.f32 %v225, %v289
      %vm298 = vcmask 130048
      %299 = vst.msk [vmem:[%s216] sm:$0xff] %vm298, %v290
      %300 = vst.msk [vmem:[%s216 + $0x8] sm:$0xff] %vm298, %v291
      %301 = vst.msk [vmem:[%s216 + $0x10] sm:$0xff] %vm298, %v292
      %302 = vst.msk [vmem:[%s216 + $0x18] sm:$0xff] %vm298, %v293
      %303 = vst.msk [vmem:[%s216 + $0x20] sm:$0xff] %vm298, %v294
      %304 = vst.msk [vmem:[%s216 + $0x28] sm:$0xff] %vm298, %v295
      %305 = vst.msk [vmem:[%s216 + $0x30] sm:$0xff] %vm298, %v296
      %306 = vst.msk [vmem:[%s216 + $0x38] sm:$0xff] %vm298, %v297
      %s307 = smul.u32 8, %s14
      %p308 = scmp.lt.s32.totalorder %s307, 15
      %s309 = scalar_select %p308, %s307, 15
      %s310 = smul.addr %s309, 8
      %s311 = scalar_lea.vmem %s3, %s310
      // Predicated region
      $region33: #{tpu_custom_call.1} parent=31 // pred_check
        %p312 = pneg %p110
      $region34: #{tpu_custom_call.1} parent=31 // pred_check_branch
        %314 = sbr.rel (%p312) target = $region36
      $region35: #{tpu_custom_call.1} parent=31 // pred_region
        %s315 = smul.u32 8, %s14
      $region36: #{tpu_custom_call.1} parent=31 // pred_fallthru
        _
    $region32: #{tpu_custom_call.1} parent=5 // pred_fallthru
      _
    %p316 = scmp.le.s32.totalorder 2, %s9
    // Predicated region
    $region37: #{tpu_custom_call.1} parent=5 // pred_check
      %p317 = pneg %p316
    $region38: #{tpu_custom_call.1} parent=5 // pred_check_branch
      %319 = sbr.rel (%p317) target = $region40
    $region39: #{tpu_custom_call.1} parent=5 // pred_region
      %s320 = ssub.s32 %s9, 2
      // Predicated region
      $region41: #{tpu_custom_call.1} parent=39 // pred_check
        %p321 = pneg %p116
      $region42: #{tpu_custom_call.1} parent=39 // pred_check_branch
        %323 = sbr.rel (%p321) target = $region44
      $region43: #{tpu_custom_call.1} parent=39 // pred_region
        %s324 = smul.u32 8, %s15
        %p325 = scmp.lt.s32.totalorder %s324, 15
        %s326 = scalar_select %p325, %s324, 15
        %s327 = smul.addr %s326, 8
        %s328 = scalar_lea.vmem %s3, %s327
      $region44: #{tpu_custom_call.1} parent=39 // pred_fallthru
        _
    $region40: #{tpu_custom_call.1} parent=5 // pred_fallthru
      _
  $region6: #{tpu_custom_call.1} parent=0 // loop_footer
    %s13 = sadd.s32 1, %s9
  $region7: #{tpu_custom_call.1} parent=0 // loop_footer_branch
    %8 = sbr.rel target = $region3
  $region8: #{tpu_custom_call.1} parent=0 // loop_exit
    _

</llo_original>
